<compile_context>
chip_gen: v7x
topology: tpu7x:2x2x1
jax: 0.10.0
libtpu: 0.0.40
codegen_flags: <defaults>
</compile_context>

<pallas_src>
import jax
import jax.numpy as jnp
from jax.experimental import pallas as pl
from jax.experimental.pallas import tpu as pltpu

LANE = 128     # lane width (last-dim tile)
SUBLANE = 8    # sublane height (second-to-last dim tile, f32)
TB_CAP = 512   # batch rows per grid step (review: 512-1024 ~ 85% HBM roofline)


def _round_up(n, m):
    return ((n + m - 1) // m) * m


def _choose_batch_tile(B):
    """Batch tile: multiple of 8, capped, and split >=2 ways when big enough (v7x: 2 TCs)."""
    b8 = _round_up(B, SUBLANE)
    tb = min(b8, TB_CAP)
    if b8 // tb < 2 and b8 >= 2 * SUBLANE:
        tb = _round_up((b8 + 1) // 2, SUBLANE)
    return tb


def basic_module_kernel(x_ref, w_ref, bs_ref, o_ref):
    # x_ref: (TB, IN)  w_ref: (IN, OUT_P)  bs_ref: (2, OUT_P) = [bias; scale]  o_ref: (TB, OUT)
    y = jnp.dot(x_ref[...], w_ref[...], preferred_element_type=jnp.float32)  # MXU, f32 acc
    bias = bs_ref[0:1, :]
    scale = bs_ref[1:2, :]
    # Fused bias + ReLU + scale, all in vregs; store only the OUT real columns.
    full = jnp.maximum(y + bias, 0.0) * scale                     # (TB, OUT_P)
    o_ref[...] = full[:, : o_ref.shape[1]].astype(o_ref.dtype)    # masked vst, no XLA slice later


def make_basic_module(w_t, b, scale):
    """Pad the constants once (hoisted out of the hot path) and return a jitted forward.

    w_t: (in_features, out_features); b, scale: (1, out_features).
    """
    IN, OUT = w_t.shape
    OUT_P = _round_up(OUT, LANE)

    # One-time, init-time padding: lane-dense resident operands for the kernel.
    w_p = jnp.zeros((IN, OUT_P), jnp.float32).at[:, :OUT].set(w_t.astype(jnp.float32))
    bs_p = (
        jnp.zeros((2, OUT_P), jnp.float32)
        .at[0, :OUT].set(b.reshape(-1).astype(jnp.float32))
        .at[1, :OUT].set(scale.reshape(-1).astype(jnp.float32))
    )

    @jax.jit
    def forward(x):
        B = x.shape[0]
        TB = _choose_batch_tile(B)
        B_P = _round_up(B, TB)

        # Pad the batch dim only when needed (never for B that's already a multiple of TB).
        x_p = x if B_P == B else jnp.zeros((B_P, IN), x.dtype).at[:B].set(x)

        out = pl.pallas_call(
            basic_module_kernel,
            out_shape=jax.ShapeDtypeStruct((B_P, OUT), jnp.float32),
            grid_spec=pl.GridSpec(
                grid=(B_P // TB,),
                in_specs=[
                    pl.BlockSpec((TB, IN), lambda i: (i, 0)),     # x: batch-tiled, features unpadded
                    pl.BlockSpec((IN, OUT_P), lambda i: (0, 0)),  # weight: resident, lane-padded at init
                    pl.BlockSpec((2, OUT_P), lambda i: (0, 0)),   # [bias; scale]: single resident operand
                ],
                out_specs=pl.BlockSpec((TB, OUT), lambda i: (i, 0)),  # (B, OUT) output, no post-slice
            ),
            compiler_params=pltpu.CompilerParams(
                dimension_semantics=("parallel",),  # independent batch tiles (v7x: shard over 2 TCs)
            ),
        )(x_p, w_p, bs_p)

        return out if B_P == B else out[:B]

    return forward


if __name__ == "__main__":
    key = jax.random.PRNGKey(0)
    k_x, k_w, k_b, k_s = jax.random.split(key, 4)

    BATCH, IN_F, OUT_F = 8, 10, 10

    # Deterministic init matching torch.nn.Linear(10, 10) + scale = randn(1, 10).
    x = jax.random.normal(k_x, (BATCH, IN_F), dtype=jnp.float32)
    w = jax.random.normal(k_w, (OUT_F, IN_F), dtype=jnp.float32) * 0.1  # (out, in) like PyTorch
    b = jax.random.normal(k_b, (1, OUT_F), dtype=jnp.float32) * 0.1
    scale = jax.random.normal(k_s, (1, OUT_F), dtype=jnp.float32)

    w_t = w.T  # (in, out) so the kernel computes x @ W^T + b directly

    # Constants padded once here, NOT per forward call.
    forward = make_basic_module(w_t, b, scale)

    out = forward(x)
    out = jax.block_until_ready(out)

    # Pure-JAX reference.
    ref = jnp.maximum(x @ w_t + b, 0.0) * scale
    assert out.shape == (BATCH, OUT_F)
    assert jnp.allclose(out, ref, atol=1e-5, rtol=1e-5)

    print("KERNEL_OK")
</pallas_src>

<mosaic_0001>
module attributes {stable_mosaic.version = 11 : i64} {
  func.func @basic_module_kernel(%arg0: i32, %arg1: memref<8x10xf32, #tpu.memory_space<vmem>>, %arg2: memref<10x128xf32, #tpu.memory_space<vmem>>, %arg3: memref<2x128xf32, #tpu.memory_space<vmem>>, %arg4: memref<8x10xf32, #tpu.memory_space<vmem>>) attributes {dimension_semantics = [#tpu.dimension_semantics<parallel>], iteration_bounds = array<i64: 1>, scalar_prefetch = 0 : i64, scratch_operands = 0 : i64, tpu.core_type = #tpu.core_type<tc>, window_params = [{transform_indices = @transform_0, window_bounds = array<i64: 8, 10>}, {pipeline_mode = #tpu.pipeline_mode<synchronous>, transform_indices = @transform_1, window_bounds = array<i64: 10, 128>}, {pipeline_mode = #tpu.pipeline_mode<synchronous>, transform_indices = @transform_2, window_bounds = array<i64: 2, 128>}, {transform_indices = @transform_3, window_bounds = array<i64: 8, 10>}]} {
    %c0 = arith.constant 0 : index
    %c0_0 = arith.constant 0 : index
    %0 = vector.load %arg1[%c0, %c0_0] : memref<8x10xf32, #tpu.memory_space<vmem>>, vector<8x10xf32>
    %c0_1 = arith.constant 0 : index
    %c0_2 = arith.constant 0 : index
    %1 = vector.load %arg2[%c0_1, %c0_2] : memref<10x128xf32, #tpu.memory_space<vmem>>, vector<10x128xf32>
    %cst = arith.constant dense<0.000000e+00> : vector<8x128xf32>
    %2 = tpu.matmul %0, %1, %cst {dimension_numbers = #tpu.dot_dimension_numbers<[1], [0], [0], [1], [0, 0, 1, 1], [], []>} : vector<8x10xf32>, vector<10x128xf32>, vector<8x128xf32> -> vector<8x128xf32>
    %c0_3 = arith.constant 0 : index
    %c0_4 = arith.constant 0 : index
    %3 = vector.load %arg3[%c0_3, %c0_4] : memref<2x128xf32, #tpu.memory_space<vmem>>, vector<1x128xf32>
    %c1 = arith.constant 1 : index
    %c0_5 = arith.constant 0 : index
    %4 = vector.load %arg3[%c1, %c0_5] : memref<2x128xf32, #tpu.memory_space<vmem>>, vector<1x128xf32>
    %5 = vector.broadcast %3 : vector<1x128xf32> to vector<8x128xf32>
    %6 = arith.addf %2, %5 : vector<8x128xf32>
    %cst_6 = arith.constant 0.000000e+00 : f32
    %7 = vector.broadcast %cst_6 : f32 to vector<8x128xf32>
    %8 = arith.maximumf %6, %7 : vector<8x128xf32>
    %9 = vector.broadcast %4 : vector<1x128xf32> to vector<8x128xf32>
    %10 = arith.mulf %8, %9 : vector<8x128xf32>
    %11 = vector.extract_strided_slice %10 {offsets = [0, 0], sizes = [8, 10], strides = [1, 1]} : vector<8x128xf32> to vector<8x10xf32>
    %c0_7 = arith.constant 0 : index
    %c0_8 = arith.constant 0 : index
    %12 = vector.load %arg4[%c0_7, %c0_8] : memref<8x10xf32, #tpu.memory_space<vmem>>, vector<8x10xf32>
    tpu.vector_store %arg4[%c0_7, %c0_8], %11 {strides = array<i32>} : memref<8x10xf32, #tpu.memory_space<vmem>>, vector<8x10xf32>,
    return
  }
  func.func @transform_0(%arg0: i32) -> (i32, i32) {
    %c0_i32 = arith.constant 0 : i32
    %c0_i32_0 = arith.constant 0 : i32
    return %arg0, %c0_i32 : i32, i32
  }
  func.func @transform_1(%arg0: i32) -> (i32, i32) {
    %c0_i32 = arith.constant 0 : i32
    %c0_i32_0 = arith.constant 0 : i32
    %c0_i32_1 = arith.constant 0 : i32
    return %c0_i32, %c0_i32_0 : i32, i32
  }
  func.func @transform_2(%arg0: i32) -> (i32, i32) {
    %c0_i32 = arith.constant 0 : i32
    %c0_i32_0 = arith.constant 0 : i32
    %c0_i32_1 = arith.constant 0 : i32
    return %c0_i32, %c0_i32_0 : i32, i32
  }
  func.func @transform_3(%arg0: i32) -> (i32, i32) {
    %c0_i32 = arith.constant 0 : i32
    %c0_i32_0 = arith.constant 0 : i32
    return %arg0, %c0_i32 : i32, i32
  }
}

</mosaic_0001>

<llo_original>
// kernel: forward.1
$region0: #{forward.1}
  #allocation0 [shape = 'u32[]', space=smem, size = 0x4, offset = 0x4, fixed_abs, tag = 'smem constant byte address 0x4 - core index']
  #allocation1 [shape = 'u32[144,128]{1,0:T(1,128)}', space=vmem, size = 0x12000, scoped, tag = 'internal scratch']
  %s0 = inlined_call_operand.hbm [shape: f32[8,10], index: 0, kind: input, shape index: {}]
  %s1 = inlined_call_operand.hbm [shape: f32[10,128], index: 1, kind: input, shape index: {}]
  %s2 = inlined_call_operand.vmem [shape: f32[2,128], index: 2, kind: input, shape index: {}]
  %s3 = inlined_call_operand.hbm [shape: f32[8,10], index: 3, kind: output, shape index: {}]
  %s4 = sld [smem:[#allocation0]]
  $region30: #{forward.1} parent=0
    _
  %s6 = ssub.s32 1, %s4
  %s7 = scalar_select 0, %s6, %s4
  $region1: #{forward.1} parent=0
    #allocation2 [shape = 'u8[4096]{0}', space=vmem, size = 0x1000, scoped, tag = 'input window, operand 0, single buffered']
    #allocation3 [shape = 's32[1]{0}', space=sflag, size = 0x4, scoped, tag = 'scoped memory for forward.1']
    #allocation4 [shape = 's32[1]{0}', space=sflag, size = 0x4, scoped, tag = 'scoped memory for forward.1']
    #allocation5 [shape = 'u8[8192]{0}', space=vmem, size = 0x2000, scoped, tag = 'input window, operand 1, single buffered']
    #allocation6 [shape = 's32[1]{0}', space=sflag, size = 0x4, scoped, tag = 'scoped memory for forward.1']
    #allocation7 [shape = 'u8[4096]{0}', space=vmem, size = 0x1000, scoped, tag = 'output window, operand 0, single buffered']
    %8 = vsyncpa [#allocation3], 0
    %9 = vsyncpa [#allocation6], 0
    %10 = vsyncpa [#allocation4], 0
    // Predicated region
    $region2: #{forward.1} parent=1 // pred_check
      _
    $region3: #{forward.1} parent=1 // pred_check_branch
      %12 = sbr.rel (0) target = $region5
    $region4: #{forward.1} parent=1 // pred_region
      %s14 = ssub.s32 128, 128
      %15 = vsyncadd [#allocation3], %s14
      %s17 = sshll.u32 [#allocation2], 4
      %s18 = int_to_ptr.vmem [resolvable:$true] %s17
      %20 = dma.hbm_to_vmem [thread:$0]  %s0, 128, %s18, [#allocation3]
    $region5: #{forward.1} parent=1 // pred_fallthru
      _
    // Predicated region
    $region6: #{forward.1} parent=1 // pred_check
      _
    $region7: #{forward.1} parent=1 // pred_check_branch
      %22 = sbr.rel (0) target = $region9
    $region8: #{forward.1} parent=1 // pred_region
      %s24 = ssub.s32 256, 256
      %25 = vsyncadd [#allocation6], %s24
      %s26 = sshll.u32 [#allocation5], 4
      %s27 = int_to_ptr.vmem [resolvable:$true] %s26
      %32 = dma.hbm_to_vmem [thread:$0]  %s1, 256, %s27, [#allocation6], 128, 128, 8
    $region9: #{forward.1} parent=1 // pred_fallthru
      _
    // Predicated region
    $region10: #{forward.1} parent=1 // pred_check
      _
    $region11: #{forward.1} parent=1 // pred_check_branch
      %34 = sbr.rel (0) target = $region13
    $region12: #{forward.1} parent=1 // pred_region
      _
    $region13: #{forward.1} parent=1 // pred_fallthru
      _
    // Predicated region
    $region14: #{forward.1} parent=1 // pred_check
      _
    $region15: #{forward.1} parent=1 // pred_check_branch
      %36 = sbr.rel (0) target = $region17
    $region16: #{forward.1} parent=1 // pred_region
      %37 = dma.done [#allocation3], 128
    $region17: #{forward.1} parent=1 // pred_fallthru
      _
    // Predicated region
    $region18: #{forward.1} parent=1 // pred_check
      _
    $region19: #{forward.1} parent=1 // pred_check_branch
      %39 = sbr.rel (0) target = $region21
    $region20: #{forward.1} parent=1 // pred_region
      %40 = dma.done [#allocation6], 256
    $region21: #{forward.1} parent=1 // pred_fallthru
      _
    %v41 = vld [vmem:[#allocation2] sm:$0xff]
    %v42 = vld [vmem:[#allocation5] sm:$0xff]
    %v43 = vld [vmem:[#allocation5 + $0x8] sm:$0x3]
    %v44 = vld [vmem:[%s2] sm:$0x1]
    %v45 = vld [vmem:[%s2 + $0x1] sm:$0x1]
    %v46 = vlaneseq
    %v47 = vshrl.u32 %v46, 7
    %v48 = vsub.s32 0, %v47
    %v49 = vrot.slane %v44, %v48
    %vm50 = vcmask 80896
    %v52 = vsel %vm50, %v41, 0
    %vm54 = vcmask 1041408
    %v56 = vsel %vm54, %v43, 0
    %58 = vmatprep.subr.mxu0 0.0
    %59 = vmatpush1.msra.mxu0 %v42
    %60 = vmatprep.subr.mxu0 0.0
    %61 = vmatpush1.msra.mxu0 %v56
    %62 = vmatprep.subr.mxu0 0.0
    %63 = vmatpush1.msra.mxu0 0.0
    %64 = vmatprep.subr.mxu0 0.0
    %65 = vmatpush1.msra.mxu0 0.0
    %66 = vmatprep.subr.mxu0 0.0
    %67 = vmatpush1.msra.mxu0 0.0
    %68 = vmatprep.subr.mxu0 0.0
    %69 = vmatpush1.msra.mxu0 0.0
    %70 = vmatprep.subr.mxu0 0.0
    %71 = vmatpush1.msra.mxu0 0.0
    %72 = vmatprep.subr.mxu0 0.0
    %73 = vmatpush1.msra.mxu0 0.0
    %74 = vmatprep.subr.mxu0 0.0
    %75 = vmatpush1.msra.mxu0 0.0
    %76 = vmatprep.subr.mxu0 0.0
    %77 = vmatpush1.msra.mxu0 0.0
    %78 = vmatprep.subr.mxu0 0.0
    %79 = vmatpush1.msra.mxu0 0.0
    %80 = vmatprep.subr.mxu0 0.0
    %81 = vmatpush1.msra.mxu0 0.0
    %82 = vmatprep.subr.mxu0 0.0
    %83 = vmatpush1.msra.mxu0 0.0
    %84 = vmatprep.subr.mxu0 0.0
    %85 = vmatpush1.msra.mxu0 0.0
    %86 = vmatprep.subr.mxu0 0.0
    %87 = vmatpush1.msra.mxu0 0.0
    %88 = vmatprep.subr.mxu0 0.0
    %89 = vmatpush1.msra.mxu0 0.0
    %90 = vmatprep.subr.mxu0 0.0
    %91 = vmatpush1.msra.mxu0 0.0
    %92 = vmatprep.subr.mxu0 0.0
    %93 = vmatpush1.msra.mxu0 0.0
    %94 = vmatprep.subr.mxu0 0.0
    %95 = vmatpush1.msra.mxu0 0.0
    %96 = vmatprep.subr.mxu0 0.0
    %97 = vmatpush1.msra.mxu0 0.0
    %98 = vmatprep.subr.mxu0 0.0
    %99 = vmatpush1.msra.mxu0 0.0
    %100 = vmatprep.subr.mxu0 0.0
    %101 = vmatpush1.msra.mxu0 0.0
    %102 = vmatprep.subr.mxu0 0.0
    %103 = vmatpush1.msra.mxu0 0.0
    %104 = vmatprep.subr.mxu0 0.0
    %105 = vmatpush1.msra.mxu0 0.0
    %106 = vmatprep.subr.mxu0 0.0
    %107 = vmatpush1.msra.mxu0 0.0
    %108 = vmatprep.subr.mxu0 0.0
    %109 = vmatpush1.msra.mxu0 0.0
    %110 = vmatprep.subr.mxu0 0.0
    %111 = vmatpush1.msra.mxu0 0.0
    %112 = vmatprep.subr.mxu0 0.0
    %113 = vmatpush1.msra.mxu0 0.0
    %114 = vmatprep.subr.mxu0 0.0
    %115 = vmatpush1.msra.mxu0 0.0
    %116 = vmatprep.subr.mxu0 0.0
    %117 = vmatpush1.msra.mxu0 0.0
    %118 = vmatprep.subr.mxu0 0.0
    %119 = vmatpush1.msra.mxu0 0.0
    %120 = vmatprep.subr.mxu0 0.0
    %121 = vmatpush1.msra.mxu0 0.0
    %122 = vmatprep.mubr.f32.mxu0 0.0
    %123 = vmatmul.mubr.f32.gmra.mrb[0].mxu0 %v52
    %v124 = vpop.f32.mrb[0].mxu0
    %v125 = vadd.f32 %v49, %v124
    %v126 = vpop.f32.mrb[0].mxu0
    %127 = vdwg.mxu0
    %v128 = vmax.f32 %v125, 0.0
    %v129 = vlaneseq
    %v130 = vshrl.u32 %v129, 7
    %v131 = vsub.s32 0, %v130
    %v132 = vrot.slane %v45, %v131
    %v133 = vmul.f32 %v128, %v132
    %134 = vst.msk [vmem:[#allocation7] sm:$0xff] %vm50, %v133
    // Predicated region
    $region22: #{forward.1} parent=1 // pred_check
      _
    $region23: #{forward.1} parent=1 // pred_check_branch
      %136 = sbr.rel (0) target = $region25
    $region24: #{forward.1} parent=1 // pred_region
      %s138 = ssub.s32 128, 128
      %139 = vsyncadd [#allocation4], %s138
      %s141 = sshll.u32 [#allocation7], 4
      %s142 = int_to_ptr.vmem [resolvable:$true] %s141
      %144 = dma.vmem_to_hbm [thread:$0]  %s142, 128, %s3, [#allocation4]
    $region25: #{forward.1} parent=1 // pred_fallthru
      _
    // Predicated region
    $region26: #{forward.1} parent=1 // pred_check
      _
    $region27: #{forward.1} parent=1 // pred_check_branch
      %146 = sbr.rel (0) target = $region29
    $region28: #{forward.1} parent=1 // pred_region
      %147 = dma.done [#allocation4], 128
    $region29: #{forward.1} parent=1 // pred_fallthru
      _
    %148 = vsyncpa [#allocation3], 1
    %149 = vsyncpa [#allocation6], 1
    %150 = vsyncpa [#allocation4], 1

</llo_original>
